<compile_context>
chip_gen: v5e
topology: v5e:2x2
jax: 0.10.0
libtpu: 0.0.40
codegen_flags: <defaults>
</compile_context>

<pallas_src>
import functools

import jax
import jax.numpy as jnp
from jax.experimental import pallas as pl
from jax.experimental.pallas import tpu as pltpu


# ------------------------------ Pallas kernel -------------------------------

def _pos_embed_kernel(x_ref, emb_ref, o_ref):
    # x_ref, emb_ref, o_ref: (max_len, d_model) blocks for one batch element.
    # Single fused VPU add; output written lane-dense (d_model on lanes).
    o_ref[...] = x_ref[...] + emb_ref[...]


def positional_embedding_forward(x, emb_table):
    """x: (B, max_len, d_model); emb_table: (max_len, d_model) -> x + emb."""
    B, S, D = x.shape
    assert emb_table.shape == (S, D), (emb_table.shape, (S, D))

    return pl.pallas_call(
        _pos_embed_kernel,
        out_shape=jax.ShapeDtypeStruct((B, S, D), x.dtype),
        grid=(B,),
        in_specs=[
            # Squeeze the batch dim out of the block -> kernel sees (S, D).
            pl.BlockSpec((None, S, D), lambda b: (b, 0, 0)),
            # Embedding table is the same block for every grid step.
            pl.BlockSpec((S, D), lambda b: (0, 0)),
        ],
        out_specs=pl.BlockSpec((None, S, D), lambda b: (b, 0, 0)),
        compiler_params=pltpu.CompilerParams(
            dimension_semantics=("parallel",)),
    )(x, emb_table)


# ------------------------------- parameters ---------------------------------

def init_params(key, max_len, d_model):
    # nn.Embedding(max_len, d_model).weight  ~ N(0, 1) in PyTorch's default init
    return {"emb": jax.random.normal(key, (max_len, d_model), dtype=jnp.float32)}


# ----------------------------------- main ------------------------------------

if __name__ == "__main__":
    MAX_LEN = 8      # max_len  (sequence length forced by expand_as)
    D_MODEL = 32     # d_model
    BATCH = 2

    key = jax.random.PRNGKey(0)
    kx, ke = jax.random.split(key)
    x = jax.random.normal(kx, (BATCH, MAX_LEN, D_MODEL), dtype=jnp.float32)
    params = init_params(ke, MAX_LEN, D_MODEL)

    fwd = jax.jit(positional_embedding_forward)
    out = fwd(x, params["emb"])
    jax.block_until_ready(out)

    # Pure-JAX reference check (positions = arange(max_len) -> full table).
    ref = x + params["emb"][None, :, :]
    assert out.shape == (BATCH, MAX_LEN, D_MODEL), out.shape
    assert out.dtype == jnp.float32
    assert jnp.allclose(out, ref, atol=1e-6, rtol=1e-6)

    print("KERNEL_OK")
</pallas_src>

<mosaic_0001>
module attributes {stable_mosaic.version = 11 : i64} {
  func.func @_pos_embed_kernel(%arg0: i32, %arg1: memref<1x8x32xf32, #tpu.memory_space<vmem>>, %arg2: memref<8x32xf32, #tpu.memory_space<vmem>>, %arg3: memref<1x8x32xf32, #tpu.memory_space<vmem>>) attributes {dimension_semantics = [#tpu.dimension_semantics<parallel>], iteration_bounds = array<i64: 2>, scalar_prefetch = 0 : i64, scratch_operands = 0 : i64, tpu.core_type = #tpu.core_type<tc>, window_params = [{transform_indices = @transform_0, window_bounds = array<i64: 1, 8, 32>}, {pipeline_mode = #tpu.pipeline_mode<synchronous>, transform_indices = @transform_1, window_bounds = array<i64: 8, 32>}, {transform_indices = @transform_2, window_bounds = array<i64: 1, 8, 32>}]} {
    %c0 = arith.constant 0 : index
    %c0_0 = arith.constant 0 : index
    %c0_1 = arith.constant 0 : index
    %0 = vector.load %arg1[%c0, %c0_0, %c0_1] : memref<1x8x32xf32, #tpu.memory_space<vmem>>, vector<1x8x32xf32>
    %1 = vector.shape_cast %0 : vector<1x8x32xf32> to vector<8x32xf32>
    %c0_2 = arith.constant 0 : index
    %c0_3 = arith.constant 0 : index
    %2 = vector.load %arg2[%c0_2, %c0_3] : memref<8x32xf32, #tpu.memory_space<vmem>>, vector<8x32xf32>
    %3 = arith.addf %1, %2 : vector<8x32xf32>
    %c0_4 = arith.constant 0 : index
    %c0_5 = arith.constant 0 : index
    %c0_6 = arith.constant 0 : index
    %4 = vector.load %arg3[%c0_4, %c0_5, %c0_6] : memref<1x8x32xf32, #tpu.memory_space<vmem>>, vector<1x8x32xf32>
    %5 = vector.shape_cast %4 : vector<1x8x32xf32> to vector<8x32xf32>
    %6 = vector.shape_cast %3 : vector<8x32xf32> to vector<1x8x32xf32>
    tpu.vector_store %arg3[%c0_4, %c0_5, %c0_6], %6 {strides = array<i32>} : memref<1x8x32xf32, #tpu.memory_space<vmem>>, vector<1x8x32xf32>,
    return
  }
  func.func @transform_0(%arg0: i32) -> (i32, i32, i32) {
    %c0_i32 = arith.constant 0 : i32
    %c0_i32_0 = arith.constant 0 : i32
    %c0_i32_1 = arith.constant 0 : i32
    return %arg0, %c0_i32, %c0_i32_0 : i32, i32, i32
  }
  func.func @transform_1(%arg0: i32) -> (i32, i32) {
    %c0_i32 = arith.constant 0 : i32
    %c0_i32_0 = arith.constant 0 : i32
    %c0_i32_1 = arith.constant 0 : i32
    return %c0_i32, %c0_i32_0 : i32, i32
  }
  func.func @transform_2(%arg0: i32) -> (i32, i32, i32) {
    %c0_i32 = arith.constant 0 : i32
    %c0_i32_0 = arith.constant 0 : i32
    %c0_i32_1 = arith.constant 0 : i32
    return %arg0, %c0_i32, %c0_i32_0 : i32, i32, i32
  }
}

</mosaic_0001>

<llo_original>
// kernel: positional_embedding_forward.1
$region0: #{positional_embedding_forward.1}
  #allocation0 [shape = 'u32[]', space=smem, size = 0x4, offset = 0x4, fixed_abs, tag = 'smem constant byte address 0x4 - core index']
  #allocation1 [shape = 'u32[72,128]{1,0:T(1,128)}', space=vmem, size = 0x9000, scoped, tag = 'internal scratch']
  %s0 = inlined_call_operand.hbm [shape: f32[2,8,32], index: 0, kind: input, shape index: {}]
  %s1 = inlined_call_operand.hbm [shape: f32[8,32], index: 1, kind: input, shape index: {}]
  %s2 = inlined_call_operand.hbm [shape: f32[2,8,32], index: 2, kind: output, shape index: {}]
  %s3 = sld [smem:[#allocation0]]
  $region49: #{positional_embedding_forward.1} parent=0
    _
  %s5 = ssub.s32 1, %s3
  %s6 = scalar_select 0, %s5, %s3
  $region1: #{positional_embedding_forward.1} parent=0
    #allocation2 [shape = 'u8[8192]{0}', space=vmem, size = 0x2000, scoped, tag = 'input window, operand 0']
    #allocation3 [shape = 's32[2]{0}', space=sflag, size = 0x8, scoped, tag = 'scoped memory for positional_embedding_forward.1']
    #allocation4 [shape = 's32[2]{0}', space=sflag, size = 0x8, scoped, tag = 'scoped memory for positional_embedding_forward.1']
    #allocation5 [shape = 'u8[4096]{0}', space=vmem, size = 0x1000, scoped, tag = 'input window, operand 1, single buffered']
    #allocation6 [shape = 's32[1]{0}', space=sflag, size = 0x4, scoped, tag = 'scoped memory for positional_embedding_forward.1']
    #allocation7 [shape = 'u8[8192]{0}', space=vmem, size = 0x2000, scoped, tag = 'output window, operand 0']
    %7 = vsyncpa [#allocation3], 0
    %s8 = scalar_lea.sflag [#allocation3], 1
    %9 = vsyncpa %s8, 0
    %10 = vsyncpa [#allocation6], 0
    %11 = vsyncpa [#allocation4], 0
    %s12 = scalar_lea.sflag [#allocation4], 1
    %13 = vsyncpa %s12, 0
    loop: start=0, step=1, limit=4
    $region2: #{positional_embedding_forward.1} parent=1 // loop_pre_header
      _
    $region3: #{positional_embedding_forward.1} parent=1 // loop_header
      %s15 = sphi 0, %s19
      %p16 = scmp.ge.s32.totalorder %s15, 4
      %s25 = sphi 0, %s27
      %s28 = sphi 0, %s25
      %s29 = sphi 0, %s28
      %s45 = sphi 0, %s29
      %s49 = sphi 0, %s49
      %s51 = sphi 0, %s49
      %s52 = sphi 0, %s51
      %s66 = sphi 0, %s52
      %s72 = sphi 0, %s74
      %s75 = sphi 0, %s72
      %s76 = sphi 0, %s75
      %s92 = sphi 0, %s76
    $region4: #{positional_embedding_forward.1} parent=1 // loop_header_branch
      %18 = sbr.rel (%p16) target = $region8
    $region5: #{positional_embedding_forward.1} parent=1 // loop_body
      %s20 = ssub.s32 %s15, 1
      %s21 = ssub.s32 %s15, 2
      %s22 = sadd.s32 %s15, 1
      %s23 = ssub.s32 %s15, %s22
      %p24 = scmp.eq.s32.totalorder %s23, 0
      %s26 = sadd.s32 %s25, 1
      %s27 = scalar_select %p24, %s25, %s26
      %p30 = pneg %p24
      %p31 = scmp.eq.s32.totalorder %s15, 1
      %p32 = por %p30, %p31
      %p33 = scmp.ne.s32.totalorder %s25, %s28
      %p34 = scmp.eq.s32.totalorder %s15, 0
      %p35 = por %p33, %p34
      %p36 = scmp.ne.s32.totalorder %s25, %s28
      %p37 = scmp.eq.s32.totalorder %s20, 1
      %p38 = por %p36, %p37
      %p39 = scmp.ne.s32.totalorder %s28, %s29
      %p40 = scmp.eq.s32.totalorder %s20, 0
      %p41 = por %p39, %p40
      %p42 = scmp.ne.s32.totalorder %s28, %s29
      %p43 = scmp.eq.s32.totalorder %s21, 1
      %p44 = por %p42, %p43
      %p46 = scmp.ne.s32.totalorder %s29, %s45
      %p47 = scmp.eq.s32.totalorder %s21, 0
      %p48 = por %p46, %p47
      %s50 = sadd.s32 %s49, 1
      %p53 = scmp.eq.s32.totalorder %s15, 1
      %p54 = scmp.ne.s32.totalorder %s49, %s51
      %p55 = scmp.eq.s32.totalorder %s15, 0
      %p56 = por %p54, %p55
      %p57 = scmp.ne.s32.totalorder %s49, %s51
      %p58 = scmp.eq.s32.totalorder %s20, 1
      %p59 = por %p57, %p58
      %p60 = scmp.ne.s32.totalorder %s51, %s52
      %p61 = scmp.eq.s32.totalorder %s20, 0
      %p62 = por %p60, %p61
      %p63 = scmp.ne.s32.totalorder %s51, %s52
      %p64 = scmp.eq.s32.totalorder %s21, 1
      %p65 = por %p63, %p64
      %p67 = scmp.ne.s32.totalorder %s52, %s66
      %p68 = scmp.eq.s32.totalorder %s21, 0
      %p69 = por %p67, %p68
      %s70 = ssub.s32 %s15, %s22
      %p71 = scmp.eq.s32.totalorder %s70, 0
      %s73 = sadd.s32 %s72, 1
      %s74 = scalar_select %p71, %s72, %s73
      %p77 = pneg %p71
      %p78 = scmp.eq.s32.totalorder %s15, 1
      %p79 = por %p77, %p78
      %p80 = scmp.ne.s32.totalorder %s72, %s75
      %p81 = scmp.eq.s32.totalorder %s15, 0
      %p82 = por %p80, %p81
      %p83 = scmp.ne.s32.totalorder %s72, %s75
      %p84 = scmp.eq.s32.totalorder %s20, 1
      %p85 = por %p83, %p84
      %p86 = scmp.ne.s32.totalorder %s75, %s76
      %p87 = scmp.eq.s32.totalorder %s20, 0
      %p88 = por %p86, %p87
      %p89 = scmp.ne.s32.totalorder %s75, %s76
      %p90 = scmp.eq.s32.totalorder %s21, 1
      %p91 = por %p89, %p90
      %p93 = scmp.ne.s32.totalorder %s76, %s92
      %p94 = scmp.eq.s32.totalorder %s21, 0
      %p95 = por %p93, %p94
      %p96 = scmp.le.s32.totalorder 1, %s15
      %p97 = scmp.lt.s32.totalorder %s15, 3
      %p98 = pnand %p96, %p97
      %p99 = pneg %p98
      // Predicated region
      $region9: #{positional_embedding_forward.1} parent=5 // pred_check
        _
      $region10: #{positional_embedding_forward.1} parent=5 // pred_check_branch
        %101 = sbr.rel (%p98) target = $region12
      $region11: #{positional_embedding_forward.1} parent=5 // pred_region
        %s102 = ssub.s32 %s15, 1
        // Predicated region
        $region13: #{positional_embedding_forward.1} parent=11 // pred_check
          %p103 = pneg %p62
        $region14: #{positional_embedding_forward.1} parent=11 // pred_check_branch
          %105 = sbr.rel (%p103) target = $region16
        $region15: #{positional_embedding_forward.1} parent=11 // pred_region
          %107 = vsyncadd [#allocation6], 0
          %s109 = sshll.u32 %s1, 4
          %s110 = int_to_ptr.hbm [resolvable:$true] %s109
          %s111 = sshll.u32 [#allocation5], 4
          %s112 = int_to_ptr.vmem [resolvable:$true] %s111
          %114 = dma.hbm_to_vmem [thread:$0]  %s110, 128, %s112, [#allocation6]
        $region16: #{positional_embedding_forward.1} parent=11 // pred_fallthru
          _
      $region12: #{positional_embedding_forward.1} parent=5 // pred_fallthru
        _
      %p115 = scmp.lt.s32.totalorder %s15, 2
      // Predicated region
      $region17: #{positional_embedding_forward.1} parent=5 // pred_check
        %p116 = pneg %p115
      $region18: #{positional_embedding_forward.1} parent=5 // pred_check_branch
        %118 = sbr.rel (%p116) target = $region20
      $region19: #{positional_embedding_forward.1} parent=5 // pred_region
        // Predicated region
        $region21: #{positional_embedding_forward.1} parent=19 // pred_check
          %p119 = pneg %p35
        $region22: #{positional_embedding_forward.1} parent=19 // pred_check_branch
          %121 = sbr.rel (%p119) target = $region24
        $region23: #{positional_embedding_forward.1} parent=19 // pred_region
          %s122 = sand.u32 %s25, 1
          %s123 = scalar_lea.sflag [#allocation3], %s122
          %s124 = sand.u32 %s25, 1
          %s125 = smul.addr %s124, 8
          %s126 = scalar_lea.vmem [#allocation2], %s125
          %128 = vsyncadd %s123, 0
          %s129 = smul.addr %s15, 8
          %s130 = scalar_lea.hbm %s0, %s129
          %s132 = sshll.u32 %s130, 4
          %s133 = int_to_ptr.hbm [resolvable:$true] %s132
          %s134 = sshll.u32 %s126, 4
          %s135 = int_to_ptr.vmem [resolvable:$true] %s134
          %137 = dma.hbm_to_vmem [thread:$0]  %s133, 128, %s135, %s123
        $region24: #{positional_embedding_forward.1} parent=19 // pred_fallthru
          _
      $region20: #{positional_embedding_forward.1} parent=5 // pred_fallthru
        _
      %p138 = scmp.le.s32.totalorder 1, %s15
      %p139 = scmp.lt.s32.totalorder %s15, 3
      %p140 = pnand %p138, %p139
      %p141 = pneg %p140
      // Predicated region
      $region25: #{positional_embedding_forward.1} parent=5 // pred_check
        _
      $region26: #{positional_embedding_forward.1} parent=5 // pred_check_branch
        %143 = sbr.rel (%p140) target = $region28
      $region27: #{positional_embedding_forward.1} parent=5 // pred_region
        %s144 = ssub.s32 %s15, 1
        %s145 = sand.u32 %s28, 1
        %s146 = scalar_lea.sflag [#allocation3], %s145
        %s147 = sand.u32 %s28, 1
        %s148 = smul.addr %s147, 8
        %s149 = scalar_lea.vmem [#allocation2], %s148
        // Predicated region
        $region29: #{positional_embedding_forward.1} parent=27 // pred_check
          %p150 = pneg %p41
        $region30: #{positional_embedding_forward.1} parent=27 // pred_check_branch
          %152 = sbr.rel (%p150) target = $region32
        $region31: #{positional_embedding_forward.1} parent=27 // pred_region
          %154 = dma.done %s146, 128
        $region32: #{positional_embedding_forward.1} parent=27 // pred_fallthru
          _
        // Predicated region
        $region33: #{positional_embedding_forward.1} parent=27 // pred_check
          %p155 = pneg %p62
        $region34: #{positional_embedding_forward.1} parent=27 // pred_check_branch
          %157 = sbr.rel (%p155) target = $region36
        $region35: #{positional_embedding_forward.1} parent=27 // pred_region
          %159 = dma.done [#allocation6], 128
        $region36: #{positional_embedding_forward.1} parent=27 // pred_fallthru
          _
        %s160 = sand.u32 %s28, 1
        %s161 = scalar_lea.sflag [#allocation3], %s160
        %s162 = sand.u32 %s28, 1
        %s163 = smul.addr %s162, 8
        %s164 = scalar_lea.vmem [#allocation2], %s163
        %p165 = pneg %p41
        %p166 = pneg %p38
        %p167 = pneg %p62
        %p168 = pneg %p59
        %p169 = pneg %p88
        %p170 = pneg %p85
        %s171 = sand.u32 %s75, 1
        %s172 = scalar_lea.sflag [#allocation4], %s171
        %s173 = sand.u32 %s75, 1
        %s174 = smul.addr %s173, 8
        %s175 = scalar_lea.vmem [#allocation7], %s174
        %v176 = vld [vmem:[%s149] sm:$0xff]
        %v177 = vld [vmem:[#allocation5] sm:$0xff]
        %v178 = vadd.f32 %v176, %v177
        %vm179 = vcmask 261120
        %180 = vst.msk [vmem:[%s175] sm:$0xff] %vm179, %v178
        %s181 = sand.u32 %s75, 1
        %s182 = scalar_lea.sflag [#allocation4], %s181
        %s183 = sand.u32 %s75, 1
        %s184 = smul.addr %s183, 8
        %s185 = scalar_lea.vmem [#allocation7], %s184
        // Predicated region
        $region37: #{positional_embedding_forward.1} parent=27 // pred_check
          %p186 = pneg %p85
        $region38: #{positional_embedding_forward.1} parent=27 // pred_check_branch
          %188 = sbr.rel (%p186) target = $region40
        $region39: #{positional_embedding_forward.1} parent=27 // pred_region
          %190 = vsyncadd %s182, 0
          %s191 = smul.addr %s20, 8
          %s192 = scalar_lea.hbm %s2, %s191
          %s194 = sshll.u32 %s185, 4
          %s195 = int_to_ptr.vmem [resolvable:$true] %s194
          %s196 = sshll.u32 %s192, 4
          %s197 = int_to_ptr.hbm [resolvable:$true] %s196
          %199 = dma.vmem_to_hbm [thread:$0]  %s195, 128, %s197, %s182
        $region40: #{positional_embedding_forward.1} parent=27 // pred_fallthru
          _
      $region28: #{positional_embedding_forward.1} parent=5 // pred_fallthru
        _
      %p200 = scmp.le.s32.totalorder 2, %s15
      // Predicated region
      $region41: #{positional_embedding_forward.1} parent=5 // pred_check
        %p201 = pneg %p200
      $region42: #{positional_embedding_forward.1} parent=5 // pred_check_branch
        %203 = sbr.rel (%p201) target = $region44
      $region43: #{positional_embedding_forward.1} parent=5 // pred_region
        %s204 = ssub.s32 %s15, 2
        // Predicated region
        $region45: #{positional_embedding_forward.1} parent=43 // pred_check
          %p205 = pneg %p91
        $region46: #{positional_embedding_forward.1} parent=43 // pred_check_branch
          %207 = sbr.rel (%p205) target = $region48
        $region47: #{positional_embedding_forward.1} parent=43 // pred_region
          %s208 = sand.u32 %s76, 1
          %s209 = scalar_lea.sflag [#allocation4], %s208
          %s210 = sand.u32 %s76, 1
          %s211 = smul.addr %s210, 8
          %s212 = scalar_lea.vmem [#allocation7], %s211
          %214 = dma.done %s209, 128
        $region48: #{positional_embedding_forward.1} parent=43 // pred_fallthru
          _
      $region44: #{positional_embedding_forward.1} parent=5 // pred_fallthru
        _
    $region6: #{positional_embedding_forward.1} parent=1 // loop_footer
      %s19 = sadd.s32 1, %s15
    $region7: #{positional_embedding_forward.1} parent=1 // loop_footer_branch
      %14 = sbr.rel target = $region3
    $region8: #{positional_embedding_forward.1} parent=1 // loop_exit
      _
    %215 = vsyncpa [#allocation3], 1
    %s216 = scalar_lea.sflag [#allocation3], 1
    %217 = vsyncpa %s216, 1
    %218 = vsyncpa [#allocation6], 1
    %219 = vsyncpa [#allocation4], 1
    %s220 = scalar_lea.sflag [#allocation4], 1
    %221 = vsyncpa %s220, 1

</llo_original>
